<compile_context>
chip_gen: v7x
topology: tpu7x:2x2x1
jax: 0.10.0
libtpu: 0.0.40
codegen_flags: <defaults>
</compile_context>

<pallas_src>
import functools

import jax
import jax.numpy as jnp
from jax import lax
from jax.experimental import pallas as pl
from jax.experimental.pallas import tpu as pltpu

F32 = jnp.float32
BF16 = jnp.bfloat16


def _round_up(v, m):
    return (v + m - 1) // m * m


def _tiling(num_nodes):
    tn = min(256, _round_up(num_nodes, 16))
    return tn, _round_up(num_nodes, tn)


def _bce_with_logits(z, t):
    # numerically stable binary_cross_entropy_with_logits (per element)
    return jnp.maximum(z, 0.0) - z * t + jnp.log(1.0 + jnp.exp(-jnp.abs(z)))


# --------------------------- kernels ---------------------------

def _feat_kernel(*refs, env, hp):
    """Layer-1 per-node linear transform (env half = row-masked copy)."""
    if env:
        x_ref, bm_ref, w1_ref, z_ref = refs
    else:
        x_ref, w1_ref, z_ref = refs
    xw = jnp.dot(x_ref[...], w1_ref[...], preferred_element_type=F32)
    if env:
        z_ref[:, :hp] = xw.astype(z_ref.dtype)
        # masking x rows before a per-row linear == masking the output rows
        z_ref[:, hp:] = (xw * (1.0 - bm_ref[...])).astype(z_ref.dtype)
    else:
        z_ref[...] = xw.astype(z_ref.dtype)


def _prop1_kernel(*refs, env, use_drop, hp):
    """Layer-1 propagation (K-tiled A@z), ReLU, dropout, layer-2 transform."""
    it = iter(refs)
    a_ref = next(it); z_ref = next(it)
    drop_ref = next(it) if use_drop else None
    b1_ref = next(it); w2_ref = next(it)
    o_ref = next(it); acc_ref = next(it)

    k = pl.program_id(1)

    @pl.when(k == 0)
    def _():
        acc_ref[...] = jnp.zeros_like(acc_ref)

    acc_ref[...] += jnp.dot(a_ref[...], z_ref[...], preferred_element_type=F32)

    @pl.when(k == pl.num_programs(1) - 1)
    def _():
        p = acc_ref[...]
        b1 = b1_ref[...]
        w2 = w2_ref[...]
        h = jnp.maximum(p[:, :hp] + b1, 0.0)
        if use_drop:
            h = h * drop_ref[...].astype(F32)
        o_ref[:, :hp] = jnp.dot(h.astype(BF16), w2,
                                preferred_element_type=F32).astype(o_ref.dtype)
        if env:
            eh = jnp.maximum(p[:, hp:] + b1, 0.0)          # env path: no dropout
            o_ref[:, hp:] = jnp.dot(eh.astype(BF16), w2,
                                    preferred_element_type=F32).astype(o_ref.dtype)


def _prop2_kernel(*refs, env, use_drop, hp):
    """Layer-2 propagation + projection + fused prototype / local-loss partials."""
    it = iter(refs)
    a_ref = next(it); z_ref = next(it)
    drop_ref = next(it) if use_drop else None
    if env:
        bm_ref = next(it); lab_ref = next(it)
    b2_ref = next(it); wp_ref = next(it); bp_ref = next(it)
    if env:
        wl_ref = next(it); bl_ref = next(it)
    gf_ref = next(it)
    pp_ref = next(it) if env else None
    acc_ref = next(it)

    k = pl.program_id(1)

    @pl.when(k == 0)
    def _():
        acc_ref[...] = jnp.zeros_like(acc_ref)

    acc_ref[...] += jnp.dot(a_ref[...], z_ref[...], preferred_element_type=F32)

    @pl.when(k == pl.num_programs(1) - 1)
    def _():
        p = acc_ref[...]
        b2 = b2_ref[...]
        wp = wp_ref[...]
        bp = bp_ref[...]
        h = jnp.maximum(p[:, :hp] + b2, 0.0)
        if use_drop:
            h = h * drop_ref[...].astype(F32)
        gf = jnp.dot(h.astype(BF16), wp, preferred_element_type=F32) + bp
        gf_ref[...] = gf
        if env:
            # env-path projection (never written to HBM)
            eh = jnp.maximum(p[:, hp:] + b2, 0.0)
            ef = jnp.dot(eh.astype(BF16), wp, preferred_element_type=F32) + bp
            bm = bm_ref[...]
            lab = lab_ref[...]
            # prototype partial sums over this row tile
            pos_part = jnp.sum(gf * (bm * lab), axis=0, keepdims=True)
            neg_part = jnp.sum(gf * (bm * (1.0 - lab)), axis=0, keepdims=True)
            # local bilinear BCE, fused here so ef is never re-read from HBM
            gwl = jnp.dot(gf.astype(BF16), wl_ref[...], preferred_element_type=F32)
            lsim = jnp.sum(gwl * ef, axis=-1, keepdims=True) + bl_ref[...]
            loc = _bce_with_logits(lsim, 1.0 - lab) * bm
            loc_part = jnp.sum(loc, axis=0, keepdims=True)       # [1,1]
            pp_ref[...] = jnp.concatenate(
                [pos_part, neg_part,
                 jnp.zeros((1, hp), F32) + loc_part,
                 jnp.zeros((5, hp), F32)], axis=0)               # tiny [8,Hp] block


def _ctx_loss_kernel(gf_ref, lab_ref, bm_ref, d_ref, out_ref):
    """Row-tiled contextual-BCE partial sums, accumulated into a (1,1) output."""
    i = pl.program_id(0)

    @pl.when(i == 0)
    def _():
        out_ref[...] = jnp.zeros_like(out_ref)

    # pos_sim - neg_sim == gf @ (Wc @ (p+ - p-)); the bilinear bias cancels
    z = jnp.sum(gf_ref[...] * d_ref[...], axis=-1, keepdims=True)
    ctx = _bce_with_logits(z, lab_ref[...]) * bm_ref[...]
    out_ref[...] += jnp.sum(ctx, axis=0, keepdims=True)


# --------------------------- plain-JAX glue ---------------------------

def build_gcn_adj(edge_index, num_nodes, num_padded):
    """Dense GCN-normalized adjacency D^{-1/2}(A + I)D^{-1/2} in bf16."""
    src, dst = edge_index[0], edge_index[1]
    A = jnp.zeros((num_nodes, num_nodes), F32)
    A = A.at[dst, src].set(1.0)
    idx = jnp.arange(num_nodes)
    A = A.at[idx, idx].set(1.0)                        # self loops
    deg = jnp.sum(A, axis=1)                           # >= 1 by construction
    dinv = lax.rsqrt(jnp.maximum(deg, 1.0))
    A = (A * dinv[:, None] * dinv[None, :]).astype(BF16)
    if num_padded != num_nodes:
        pad = num_padded - num_nodes
        A = jnp.pad(A, ((0, pad), (0, pad)))
    return A


def init_params(key, in_channels, hidden):
    ks = jax.random.split(key, 6)

    def glorot(k, shape):
        lim = (6.0 / (shape[0] + shape[1])) ** 0.5
        return jax.random.uniform(k, shape, F32, -lim, lim)

    return dict(
        w1=glorot(ks[0], (in_channels, hidden)), b1=jnp.zeros((hidden,), F32),
        w2=glorot(ks[1], (hidden, hidden)),      b2=jnp.zeros((hidden,), F32),
        wp=glorot(ks[2], (hidden, hidden)),
        bp=0.01 * jax.random.normal(ks[3], (hidden,), F32),
        wc=glorot(ks[4], (hidden, hidden)),      bc=jnp.zeros((1,), F32),
        wl=glorot(ks[5], (hidden, hidden)),      bl=jnp.zeros((1,), F32),
    )


def guidance_forward(x, edge_index, batch_nodes, labels, params, *,
                     beta=0.5, training=True, rng_key=None, adj=None,
                     dropout_p=0.5):
    N, Cin = x.shape
    H = params["w1"].shape[1]
    Hp = _round_up(H, 128)                 # lane-dense hidden dim
    TN, Np = _tiling(N)                    # row tile, padded node count
    nt = Np // TN
    kt = Np // TN                          # K tile == row tile

    env = bool(training)                   # env path + losses only in training
    use_drop = bool(training) and dropout_p > 0.0
    Hcat = 2 * Hp if env else Hp

    # ---- padding & dtype diet (padded rows never reach real outputs) ----
    xp = jnp.zeros((Np, Cin), BF16).at[:N].set(x.astype(BF16))
    bmask = jnp.zeros((Np, 1), F32).at[batch_nodes, 0].set(1.0)
    if labels is None:                     # -> pos_cnt == 0 -> loss stays 0
        lab = jnp.zeros((Np, 1), F32)
    else:
        lab = jnp.zeros((Np, 1), F32).at[:N, 0].set(labels.astype(F32))
    A = build_gcn_adj(edge_index, N, Np) if adj is None else adj

    def pad_cols(w, cols):
        return jnp.zeros((w.shape[0], cols), F32).at[:, :w.shape[1]].set(w)

    def pad_sq(w, n):
        return jnp.zeros((n, n), F32).at[:w.shape[0], :w.shape[1]].set(w)

    w1 = pad_cols(params["w1"], Hp).astype(BF16)
    w2 = pad_sq(params["w2"], Hp).astype(BF16)
    wp = pad_sq(params["wp"], Hp).astype(BF16)
    wl = pad_sq(params["wl"], Hp).astype(BF16)
    wc = pad_sq(params["wc"], Hp)                      # f32, wrapper-only
    b1 = jnp.zeros((1, Hp), F32).at[0, :H].set(params["b1"])
    b2 = jnp.zeros((1, Hp), F32).at[0, :H].set(params["b2"])
    bp = jnp.zeros((1, Hp), F32).at[0, :H].set(params["bp"])
    bl = params["bl"].reshape(1, 1).astype(F32)

    if use_drop:
        if rng_key is None:
            rng_key = jax.random.PRNGKey(0)
        keep = 1.0 - dropout_p
        k1, k2 = jax.random.split(rng_key)
        # TODO(synk): generate in-kernel with pltpu.prng_seed/prng_random_bits
        # on real TPUs; bf16 {0, 1/keep} values are exact.
        drop1 = (jax.random.bernoulli(k1, keep, (Np, Hp)).astype(F32) / keep).astype(BF16)
        drop2 = (jax.random.bernoulli(k2, keep, (Np, Hp)).astype(F32) / keep).astype(BF16)

    # ---- spec helpers ----
    def row(c):
        return pl.BlockSpec((TN, c), lambda i: (i, 0))

    def rowk(c):
        return pl.BlockSpec((TN, c), lambda i, k: (i, 0))

    def full1(arr):
        return pl.BlockSpec(arr.shape, lambda i: (0,) * arr.ndim)

    def fullk(arr):
        return pl.BlockSpec(arr.shape, lambda i, k: (0,) * arr.ndim)

    a_spec = pl.BlockSpec((TN, TN), lambda i, k: (i, k))
    zk_spec = pl.BlockSpec((TN, Hcat), lambda i, k: (k, 0))
    zo_spec = pl.BlockSpec((TN, Hcat), lambda i, k: (i, 0))

    # ---- call 1: layer-1 per-node transform (guidance + masked env) ----
    args1, specs1 = [xp], [row(Cin)]
    if env:
        args1.append(bmask); specs1.append(row(1))
    args1.append(w1); specs1.append(full1(w1))
    z1 = pl.pallas_call(
        functools.partial(_feat_kernel, env=env, hp=Hp),
        grid=(nt,),
        in_specs=specs1,
        out_specs=row(Hcat),
        out_shape=jax.ShapeDtypeStruct((Np, Hcat), BF16),
        compiler_params=pltpu.CompilerParams(dimension_semantics=("parallel",)),
    )(*args1)

    # ---- call 2: layer-1 propagation (K-tiled) + ReLU/dropout + layer-2 transform ----
    args2, specs2 = [A, z1], [a_spec, zk_spec]
    if use_drop:
        args2.append(drop1); specs2.append(rowk(Hp))
    args2 += [b1, w2]; specs2 += [fullk(b1), fullk(w2)]
    z2 = pl.pallas_call(
        functools.partial(_prop1_kernel, env=env, use_drop=use_drop, hp=Hp),
        grid=(nt, kt),
        in_specs=specs2,
        out_specs=zo_spec,
        out_shape=jax.ShapeDtypeStruct((Np, Hcat), BF16),
        scratch_shapes=[pltpu.VMEM((TN, Hcat), F32)],
        compiler_params=pltpu.CompilerParams(
            dimension_semantics=("parallel", "arbitrary")),
    )(*args2)

    # ---- call 3: layer-2 propagation + projection (+ fused loss partials) ----
    args3, specs3 = [A, z2], [a_spec, zk_spec]
    if use_drop:
        args3.append(drop2); specs3.append(rowk(Hp))
    if env:
        args3 += [bmask, lab]; specs3 += [rowk(1), rowk(1)]
    args3 += [b2, wp, bp]; specs3 += [fullk(b2), fullk(wp), fullk(bp)]
    if env:
        args3 += [wl, bl]; specs3 += [fullk(wl), fullk(bl)]
    gf_spec = pl.BlockSpec((TN, Hp), lambda i, k: (i, 0))
    if env:
        out_shape3 = (jax.ShapeDtypeStruct((Np, Hp), F32),
                      jax.ShapeDtypeStruct((nt * 8, Hp), F32))
        out_specs3 = (gf_spec, pl.BlockSpec((8, Hp), lambda i, k: (i, 0)))
    else:
        out_shape3 = jax.ShapeDtypeStruct((Np, Hp), F32)
        out_specs3 = gf_spec
    res = pl.pallas_call(
        functools.partial(_prop2_kernel, env=env, use_drop=use_drop, hp=Hp),
        grid=(nt, kt),
        in_specs=specs3,
        out_specs=out_specs3,
        out_shape=out_shape3,
        scratch_shapes=[pltpu.VMEM((TN, Hcat), F32)],
        compiler_params=pltpu.CompilerParams(
            dimension_semantics=("parallel", "arbitrary")),
    )(*args3)

    if not env:
        return res[:N, :H], jnp.zeros((), F32)

    gf_full, pp = res
    pp3 = pp.reshape(nt, 8, Hp)

    bsum = jnp.sum(bmask)
    pos_cnt = jnp.sum(bmask * lab)
    neg_cnt = jnp.sum(bmask * (1.0 - lab))
    pos_proto = pp3[:, 0, :].sum(axis=0) / jnp.maximum(pos_cnt, 1.0)
    neg_proto = pp3[:, 1, :].sum(axis=0) / jnp.maximum(neg_cnt, 1.0)
    loc_sum = pp3[:, 2, 0].sum()
    # contextual bilinear reassociation (bias cancels in pos_sim - neg_sim)
    d = (wc @ (pos_proto - neg_proto)).reshape(1, Hp)

    # ---- call 4: mem-bound contextual-BCE sweep over gf ----
    ctx_sum = pl.pallas_call(
        _ctx_loss_kernel,
        grid=(nt,),
        in_specs=[row(Hp), row(1), row(1), full1(d)],
        out_specs=pl.BlockSpec((1, 1), lambda i: (0, 0)),
        out_shape=jax.ShapeDtypeStruct((1, 1), F32),
        compiler_params=pltpu.CompilerParams(dimension_semantics=("arbitrary",)),
    )(gf_full, lab, bmask, d)[0, 0]

    valid = jnp.logical_and(pos_cnt > 0.0, neg_cnt > 0.0)
    total = (beta * ctx_sum + (1.0 - beta) * loc_sum) / jnp.maximum(bsum, 1.0)
    loss = jnp.where(valid, total, jnp.zeros_like(total))
    return gf_full[:N, :H], loss


# --------------------------- demo / self-check ---------------------------

if __name__ == "__main__":
    key = jax.random.PRNGKey(0)
    N, Cin, H, E = 32, 16, 32, 64
    k1, k2, k3, k4 = jax.random.split(key, 4)

    x = jax.random.normal(k1, (N, Cin), F32)
    src = jax.random.randint(k2, (E,), 0, N)
    dst = jax.random.randint(k3, (E,), 0, N)
    edge_index = jnp.stack([jnp.concatenate([src, dst]),
                            jnp.concatenate([dst, src])])      # symmetric graph

    batch_nodes = jnp.arange(8, dtype=jnp.int32)
    labels = jnp.array([1, 0, 1, 0, 1, 1, 0, 0] + [0] * (N - 8), jnp.int32)

    params = init_params(jax.random.PRNGKey(42), Cin, H)

    # graph is static -> build the dense normalized adjacency once and reuse it
    _, Np_pad = _tiling(N)
    A_pad = build_gcn_adj(edge_index, N, Np_pad)

    # -- training forward (dropout p=0.5): features + guidance loss --
    gf, loss = guidance_forward(x, edge_index, batch_nodes, labels, params,
                                beta=0.5, training=True, rng_key=k4, adj=A_pad)
    jax.block_until_ready((gf, loss))
    assert gf.shape == (N, H) and gf.dtype == jnp.float32
    assert loss.shape == () and bool(jnp.isfinite(loss))

    # -- pure-JAX f32 reference (same dense GCN formulation) --
    A_ref = jnp.zeros((N, N), F32).at[edge_index[1], edge_index[0]].set(1.0)
    A_ref = A_ref.at[jnp.arange(N), jnp.arange(N)].set(1.0)
    dinv = 1.0 / jnp.sqrt(A_ref.sum(axis=1))
    A_ref = A_ref * dinv[:, None] * dinv[None, :]

    def gcn_proj(feat):
        h = jax.nn.relu(A_ref @ (feat @ params["w1"]) + params["b1"])
        h = jax.nn.relu(A_ref @ (h @ params["w2"]) + params["b2"])
        return h @ params["wp"] + params["bp"]

    gf_ref = gcn_proj(x)

    # -- eval forward (no dropout, loss == 0) --
    gf_eval, loss_eval = guidance_forward(x, edge_index, batch_nodes, labels,
                                          params, beta=0.5, training=False,
                                          adj=A_pad)
    jax.block_until_ready((gf_eval, loss_eval))
    assert jnp.allclose(gf_eval, gf_ref, rtol=5e-2, atol=5e-2)   # bf16 MXU tol
    assert float(loss_eval) == 0.0

    # -- training path with dropout disabled: full loss check vs pure-JAX ref --
    gf_t, loss_t = guidance_forward(x, edge_index, batch_nodes, labels, params,
                                    beta=0.5, training=True, rng_key=k4,
                                    adj=A_pad, dropout_p=0.0)
    jax.block_until_ready((gf_t, loss_t))
    assert jnp.allclose(gf_t, gf_ref, rtol=5e-2, atol=5e-2)

    blab = labels[batch_nodes].astype(F32)[:, None]
    bf = gf_ref[batch_nodes]
    pos_w, neg_w = blab, 1.0 - blab
    pos_proto = (bf * pos_w).sum(0) / pos_w.sum()
    neg_proto = (bf * neg_w).sum(0) / neg_w.sum()
    ctx_logit = (bf @ params["wc"]) @ (pos_proto - neg_proto)
    ctx_loss = _bce_with_logits(ctx_logit[:, None], blab).mean()
    ef_ref = gcn_proj(x.at[batch_nodes].set(0.0))
    lsim = jnp.sum((bf @ params["wl"]) * ef_ref[batch_nodes], axis=-1,
                   keepdims=True) + params["bl"]
    loc_loss = _bce_with_logits(lsim, 1.0 - blab).mean()
    loss_ref = 0.5 * ctx_loss + 0.5 * loc_loss
    assert jnp.allclose(loss_t, loss_ref, rtol=1e-1, atol=1e-1), \
        (float(loss_t), float(loss_ref))

    print("KERNEL_OK")
</pallas_src>

<mosaic_0001>
module attributes {stable_mosaic.version = 11 : i64} {
  func.func @_feat_kernel(%arg0: i32, %arg1: memref<32x16xbf16, #tpu.memory_space<vmem>>, %arg2: memref<32x1xf32, #tpu.memory_space<vmem>>, %arg3: memref<16x128xbf16, #tpu.memory_space<vmem>>, %arg4: memref<32x256xbf16, #tpu.memory_space<vmem>>) attributes {dimension_semantics = [#tpu.dimension_semantics<parallel>], iteration_bounds = array<i64: 1>, scalar_prefetch = 0 : i64, scratch_operands = 0 : i64, tpu.core_type = #tpu.core_type<tc>, window_params = [{transform_indices = @transform_0, window_bounds = array<i64: 32, 16>}, {transform_indices = @transform_1, window_bounds = array<i64: 32, 1>}, {pipeline_mode = #tpu.pipeline_mode<synchronous>, transform_indices = @transform_2, window_bounds = array<i64: 16, 128>}, {transform_indices = @transform_3, window_bounds = array<i64: 32, 256>}]} {
    %c0 = arith.constant 0 : index
    %c0_0 = arith.constant 0 : index
    %0 = vector.load %arg1[%c0, %c0_0] : memref<32x16xbf16, #tpu.memory_space<vmem>>, vector<32x16xbf16>
    %c0_1 = arith.constant 0 : index
    %c0_2 = arith.constant 0 : index
    %1 = vector.load %arg3[%c0_1, %c0_2] : memref<16x128xbf16, #tpu.memory_space<vmem>>, vector<16x128xbf16>
    %cst = arith.constant dense<0.000000e+00> : vector<32x128xf32>
    %2 = tpu.matmul %0, %1, %cst {dimension_numbers = #tpu.dot_dimension_numbers<[1], [0], [0], [1], [0, 0, 1, 1], [], []>} : vector<32x16xbf16>, vector<16x128xbf16>, vector<32x128xf32> -> vector<32x128xf32>
    %3 = arith.truncf %2 : vector<32x128xf32> to vector<32x128xbf16>
    %c0_3 = arith.constant 0 : index
    %c0_4 = arith.constant 0 : index
    %4 = vector.load %arg4[%c0_3, %c0_4] : memref<32x256xbf16, #tpu.memory_space<vmem>>, vector<32x128xbf16>
    tpu.vector_store %arg4[%c0_3, %c0_4], %3 {strides = array<i32>} : memref<32x256xbf16, #tpu.memory_space<vmem>>, vector<32x128xbf16>,
    %c0_5 = arith.constant 0 : index
    %c0_6 = arith.constant 0 : index
    %5 = vector.load %arg2[%c0_5, %c0_6] : memref<32x1xf32, #tpu.memory_space<vmem>>, vector<32x1xf32>
    %cst_7 = arith.constant 1.000000e+00 : f32
    %6 = vector.broadcast %cst_7 : f32 to vector<32x1xf32>
    %7 = arith.subf %6, %5 : vector<32x1xf32>
    %8 = vector.broadcast %7 : vector<32x1xf32> to vector<32x128xf32>
    %9 = arith.mulf %2, %8 : vector<32x128xf32>
    %10 = arith.truncf %9 : vector<32x128xf32> to vector<32x128xbf16>
    %c0_8 = arith.constant 0 : index
    %c128 = arith.constant 128 : index
    %11 = vector.load %arg4[%c0_8, %c128] : memref<32x256xbf16, #tpu.memory_space<vmem>>, vector<32x128xbf16>
    tpu.vector_store %arg4[%c0_8, %c128], %10 {strides = array<i32>} : memref<32x256xbf16, #tpu.memory_space<vmem>>, vector<32x128xbf16>,
    return
  }
  func.func @transform_0(%arg0: i32) -> (i32, i32) {
    %c0_i32 = arith.constant 0 : i32
    %c0_i32_0 = arith.constant 0 : i32
    return %arg0, %c0_i32 : i32, i32
  }
  func.func @transform_1(%arg0: i32) -> (i32, i32) {
    %c0_i32 = arith.constant 0 : i32
    %c0_i32_0 = arith.constant 0 : i32
    return %arg0, %c0_i32 : i32, i32
  }
  func.func @transform_2(%arg0: i32) -> (i32, i32) {
    %c0_i32 = arith.constant 0 : i32
    %c0_i32_0 = arith.constant 0 : i32
    %c0_i32_1 = arith.constant 0 : i32
    return %c0_i32, %c0_i32_0 : i32, i32
  }
  func.func @transform_3(%arg0: i32) -> (i32, i32) {
    %c0_i32 = arith.constant 0 : i32
    %c0_i32_0 = arith.constant 0 : i32
    return %arg0, %c0_i32 : i32, i32
  }
}

</mosaic_0001>

<llo_original>
// kernel: tpu_custom_call.1
$region0: #{tpu_custom_call.1}
  #allocation0 [shape = 'u32[]', space=smem, size = 0x4, offset = 0x4, fixed_abs, tag = 'smem constant byte address 0x4 - core index']
  #allocation1 [shape = 'u32[144,128]{1,0:T(1,128)}', space=vmem, size = 0x12000, scoped, tag = 'internal scratch']
  %s0 = inlined_call_operand.vmem [shape: bf16[32,16], index: 0, kind: input, shape index: {}]
  %s1 = inlined_call_operand.vmem [shape: f32[32,1], index: 1, kind: input, shape index: {}]
  %s2 = inlined_call_operand.vmem [shape: bf16[16,128], index: 2, kind: input, shape index: {}]
  %s3 = inlined_call_operand.hbm [shape: bf16[32,256], index: 3, kind: output, shape index: {}]
  %s4 = sld [smem:[#allocation0]]
  $region22: #{tpu_custom_call.1} parent=0
    _
  %s6 = ssub.s32 1, %s4
  %s7 = scalar_select 0, %s6, %s4
  $region1: #{tpu_custom_call.1} parent=0
    #allocation2 [shape = 'u8[16384]{0}', space=vmem, size = 0x4000, scoped, tag = 'output window, operand 0, single buffered']
    #allocation3 [shape = 's32[1]{0}', space=sflag, size = 0x4, scoped, tag = 'scoped memory for tpu_custom_call.1']
    %8 = vsyncpa [#allocation3], 0
    // Predicated region
    $region2: #{tpu_custom_call.1} parent=1 // pred_check
      _
    $region3: #{tpu_custom_call.1} parent=1 // pred_check_branch
      %10 = sbr.rel (0) target = $region5
    $region4: #{tpu_custom_call.1} parent=1 // pred_region
      _
    $region5: #{tpu_custom_call.1} parent=1 // pred_fallthru
      _
    // Predicated region
    $region6: #{tpu_custom_call.1} parent=1 // pred_check
      _
    $region7: #{tpu_custom_call.1} parent=1 // pred_check_branch
      %12 = sbr.rel (0) target = $region9
    $region8: #{tpu_custom_call.1} parent=1 // pred_region
      _
    $region9: #{tpu_custom_call.1} parent=1 // pred_fallthru
      _
    // Predicated region
    $region10: #{tpu_custom_call.1} parent=1 // pred_check
      _
    $region11: #{tpu_custom_call.1} parent=1 // pred_check_branch
      %14 = sbr.rel (0) target = $region13
    $region12: #{tpu_custom_call.1} parent=1 // pred_region
      _
    $region13: #{tpu_custom_call.1} parent=1 // pred_fallthru
      _
    %v16 = vld [vmem:[%s0] sm:$0xf]
    %v17 = vld [vmem:[%s0 + $0x4] sm:$0xf]
    %v18 = vld [vmem:[%s0 + $0x8] sm:$0xf]
    %v19 = vld [vmem:[%s0 + $0xc] sm:$0xf]
    %v20 = vld [vmem:[%s2] sm:$0xf]
    %v21 = vld [vmem:[%s2 + $0x4] sm:$0xf]
    %v26 = vunpack.c.l.b16 %v16
    %v27 = vunpack.c.l.b16 %v17
    %v28 = vunpack.c.l.b16 %v18
    %v29 = vunpack.c.l.b16 %v19
    %v30 = vpack.c.b16 %v27, %v26
    %v31 = vpack.c.b16 %v29, %v28
    %v34 = vunpack.c.l.b16 %v20
    %v35 = vunpack.c.l.b16 %v21
    %v36 = vpack.c.b16 %v35, %v34
    %vm38 = vcmask 130048
    %v40 = vsel %vm38, %v30, 0
    %v43 = vsel %vm38, %v31, 0
    %45 = vmatprep.subr.bf16.mxu0 0
    %46 = vmatpush1.bf16.msra.mxu0 %v36
    %47 = vmatprep.subr.bf16.mxu0 0
    %48 = vmatpush1.bf16.msra.mxu0 0
    %49 = vmatprep.subr.bf16.mxu0 0
    %50 = vmatpush1.bf16.msra.mxu0 0
    %51 = vmatprep.subr.bf16.mxu0 0
    %52 = vmatpush1.bf16.msra.mxu0 0
    %53 = vmatprep.subr.bf16.mxu0 0
    %54 = vmatpush1.bf16.msra.mxu0 0
    %55 = vmatprep.subr.bf16.mxu0 0
    %56 = vmatpush1.bf16.msra.mxu0 0
    %57 = vmatprep.subr.bf16.mxu0 0
    %58 = vmatpush1.bf16.msra.mxu0 0
    %59 = vmatprep.subr.bf16.mxu0 0
    %60 = vmatpush1.bf16.msra.mxu0 0
    %61 = vmatprep.subr.bf16.mxu0 0
    %62 = vmatpush1.bf16.msra.mxu0 0
    %63 = vmatprep.subr.bf16.mxu0 0
    %64 = vmatpush1.bf16.msra.mxu0 0
    %65 = vmatprep.subr.bf16.mxu0 0
    %66 = vmatpush1.bf16.msra.mxu0 0
    %67 = vmatprep.subr.bf16.mxu0 0
    %68 = vmatpush1.bf16.msra.mxu0 0
    %69 = vmatprep.subr.bf16.mxu0 0
    %70 = vmatpush1.bf16.msra.mxu0 0
    %71 = vmatprep.subr.bf16.mxu0 0
    %72 = vmatpush1.bf16.msra.mxu0 0
    %73 = vmatprep.subr.bf16.mxu0 0
    %74 = vmatpush1.bf16.msra.mxu0 0
    %75 = vmatprep.subr.bf16.mxu0 0
    %76 = vmatpush1.bf16.msra.mxu0 0
    %77 = vmatprep.mubr.bf16.mxu0 0
    %78 = vmatmul.mubr.bf16.gmra.mrb[0].mxu0 %v40
    %v79 = vpop.f32.mrb[0].mxu0
    %v80 = vadd.f32 0.0, %v79
    %v81 = vpop.f32.mrb[0].mxu0
    %v82 = vpop.f32.mrb[0].mxu0
    %v83 = vadd.f32 0.0, %v82
    %v84 = vpop.f32.mrb[0].mxu0
    %85 = vmatprep.mubr.bf16.mxu0 0
    %86 = vmatmul.mubr.bf16.gmra.mrb[0].mxu0 %v43
    %v87 = vpop.f32.mrb[0].mxu0
    %v88 = vadd.f32 0.0, %v87
    %v89 = vpop.f32.mrb[0].mxu0
    %v90 = vpop.f32.mrb[0].mxu0
    %v91 = vadd.f32 0.0, %v90
    %v92 = vpop.f32.mrb[0].mxu0
    %93 = vdwg.mxu0
    %v94 = vpack.c.bf16 %v83, %v80
    %v95 = vpack.c.bf16 %v91, %v88
    %v98 = vunpack.c.l.b16 %v94
    %v99 = vunpack.c.h.b16 %v94
    %v100 = vunpack.c.l.b16 %v95
    %v101 = vunpack.c.h.b16 %v95
    %v102 = vpack.c.b16 %v98, %v98
    %v103 = vpack.c.b16 %v99, %v99
    %v104 = vpack.c.b16 %v100, %v100
    %v105 = vpack.c.b16 %v101, %v101
    %110 = vst [vmem:[#allocation2] sm:$0xf] %v102
    %111 = vst [vmem:[#allocation2 + $0x8] sm:$0xf] %v103
    %112 = vst [vmem:[#allocation2 + $0x10] sm:$0xf] %v104
    %113 = vst [vmem:[#allocation2 + $0x18] sm:$0xf] %v105
    %v114 = vld [vmem:[%s1] sm:$0xff]
    %v115 = vld [vmem:[%s1 + $0x8] sm:$0xff]
    %v116 = vld [vmem:[%s1 + $0x10] sm:$0xff]
    %v117 = vld [vmem:[%s1 + $0x18] sm:$0xff]
    %v118 = vsub.f32 1.0, %v114
    %v119 = vsub.f32 1.0, %v115
    %v120 = vsub.f32 1.0, %v116
    %v121 = vsub.f32 1.0, %v117
    %123 = vset.pattern.permute.xlu0 0
    %124 = vperm.xlu0 %123, %v118
    %v125 = vpop.permute.xlu0 %124
    %128 = vset.pattern.permute.xlu0 0
    %129 = vperm.xlu0 %128, %v119
    %v130 = vpop.permute.xlu0 %129
    %133 = vset.pattern.permute.xlu0 0
    %134 = vperm.xlu0 %133, %v120
    %v135 = vpop.permute.xlu0 %134
    %138 = vset.pattern.permute.xlu0 0
    %139 = vperm.xlu0 %138, %v121
    %v140 = vpop.permute.xlu0 %139
    %v142 = vmul.f32 %v80, %v125
    %v143 = vmul.f32 %v83, %v130
    %v144 = vmul.f32 %v88, %v135
    %v145 = vmul.f32 %v91, %v140
    %v146 = vpack.c.bf16 %v143, %v142
    %v147 = vpack.c.bf16 %v145, %v144
    %v150 = vunpack.c.l.b16 %v146
    %v151 = vunpack.c.h.b16 %v146
    %v152 = vunpack.c.l.b16 %v147
    %v153 = vunpack.c.h.b16 %v147
    %v154 = vpack.c.b16 %v150, %v150
    %v155 = vpack.c.b16 %v151, %v151
    %v156 = vpack.c.b16 %v152, %v152
    %v157 = vpack.c.b16 %v153, %v153
    %162 = vst [vmem:[#allocation2 + $0x4] sm:$0xf] %v154
    %163 = vst [vmem:[#allocation2 + $0xc] sm:$0xf] %v155
    %164 = vst [vmem:[#allocation2 + $0x14] sm:$0xf] %v156
    %165 = vst [vmem:[#allocation2 + $0x1c] sm:$0xf] %v157
    // Predicated region
    $region14: #{tpu_custom_call.1} parent=1 // pred_check
      _
    $region15: #{tpu_custom_call.1} parent=1 // pred_check_branch
      %167 = sbr.rel (0) target = $region17
    $region16: #{tpu_custom_call.1} parent=1 // pred_region
      %s169 = ssub.s32 512, 512
      %170 = vsyncadd [#allocation3], %s169
      %s171 = sshll.u32 [#allocation2], 4
      %s172 = int_to_ptr.vmem [resolvable:$true] %s171
      %177 = dma.vmem_to_hbm [thread:$0]  %s172, 512, %s3, [#allocation3], 128, 128, 8
    $region17: #{tpu_custom_call.1} parent=1 // pred_fallthru
      _
    // Predicated region
    $region18: #{tpu_custom_call.1} parent=1 // pred_check
      _
    $region19: #{tpu_custom_call.1} parent=1 // pred_check_branch
      %179 = sbr.rel (0) target = $region21
    $region20: #{tpu_custom_call.1} parent=1 // pred_region
      %180 = dma.done [#allocation3], 512
    $region21: #{tpu_custom_call.1} parent=1 // pred_fallthru
      _
    %181 = vsyncpa [#allocation3], 1

</llo_original>
